<compile_context>
chip_gen: v6e
topology: v6e:2x2x1
jax: 0.10.0
libtpu: 0.0.40
codegen_flags: <defaults>
</compile_context>

<pallas_src>
import jax
import jax.numpy as jnp
from jax.experimental import pallas as pl
from jax.experimental.pallas import tpu as pltpu


def _nonoise_matmul_kernel(x_ref, ht_ref, b_ref, o_ref):
    """One (rows, tk) @ (tk, tn) step of y = x @ Ht_half + bias.

    Output block is resident across the K (last) grid axis and used directly
    as the f32 accumulator.
    """
    k = pl.program_id(1)

    @pl.when(k == 0)
    def _():
        o_ref[...] = jnp.zeros_like(o_ref)

    o_ref[...] += jnp.dot(
        x_ref[...], ht_ref[...], preferred_element_type=jnp.float32
    )

    @pl.when(k == pl.num_programs(1) - 1)
    def _():
        # bias has shape (1, tn) and broadcasts over the row dimension.
        o_ref[...] += b_ref[...]


def prepare_nonoise_params(H):
    """One-time 'model setup': fold the (x+1)/2 rescale into the operator.

    Returns:
      Ht_half: (N, M) = 0.5 * H^T   (lane-dense RHS for the kernel)
      bias:    (1, M) = 0.5 * sum(H, axis=1)
    """
    H = jnp.asarray(H, jnp.float32)
    ht_half = 0.5 * H.T                               # (N, M)
    bias = (0.5 * jnp.sum(H, axis=1)).reshape(1, -1)  # (1, M)
    return ht_half, bias


def _pick_tile(dim, cap):
    """Largest multiple of 128 that divides `dim` and is <= cap."""
    t = min(cap, dim)
    t -= t % 128
    while t >= 128:
        if dim % t == 0:
            return t
        t -= 128
    raise ValueError(f"dimension {dim} must be a multiple of 128")


def nonoise_forward(x, ht_half, bias, *, tk_cap=1024, tn_cap=2048):
    """NoNoise(Linear(H)) forward.

    Args:
      x:       (B, C, h, w) float32 images in [-1, 1]  (NCHW layout)
      ht_half: (N, M) = 0.5 * H^T   (from prepare_nonoise_params)
      bias:    (1, M) = 0.5 * sum(H, axis=1)
    Returns:
      y: (B, C, M) float32 measurements
    """
    B, C, h, w = x.shape
    N, M = ht_half.shape
    assert N == h * w, "H column count must equal h*w"
    assert bias.shape == (1, M)

    rows = B * C
    # Pad rows up to a sublane multiple of 8 so block shapes are legal.
    rows_pad = max(8, ((rows + 7) // 8) * 8)

    x_flat = x.reshape(rows, N).astype(jnp.float32)
    if rows_pad != rows:
        x_flat = jnp.pad(x_flat, ((0, rows_pad - rows), (0, 0)))

    # Tile sizes: big (bandwidth-bound regime), multiples of 128, dividing N/M.
    tk = _pick_tile(N, tk_cap)
    tn = _pick_tile(M, tn_cap)

    # VMEM budget: double-buffered x and Ht streams + bias + resident output,
    # with 2x headroom, capped at 64 MiB (v7x physical VMEM).
    vmem_need = 4 * (
        2 * rows_pad * tk      # x tiles (double-buffered)
        + 2 * tk * tn          # Ht tiles (double-buffered)
        + 2 * 1 * tn           # bias tiles
        + 2 * rows_pad * tn    # output block
    )
    vmem_limit = int(min(max(2 * vmem_need, 32 << 20), 64 << 20))

    grid = (M // tn, N // tk)  # (parallel M axis, reduction K axis last)

    y_pad = pl.pallas_call(
        _nonoise_matmul_kernel,
        out_shape=jax.ShapeDtypeStruct((rows_pad, M), jnp.float32),
        grid_spec=pl.GridSpec(
            grid=grid,
            in_specs=[
                pl.BlockSpec((rows_pad, tk), lambda n, k: (0, k)),  # x
                pl.BlockSpec((tk, tn), lambda n, k: (k, n)),        # Ht_half
                pl.BlockSpec((1, tn), lambda n, k: (0, n)),         # bias
            ],
            out_specs=pl.BlockSpec((rows_pad, tn), lambda n, k: (0, n)),
        ),
        compiler_params=pltpu.CompilerParams(
            dimension_semantics=("parallel", "arbitrary"),
            vmem_limit_bytes=vmem_limit,
        ),
    )(x_flat, ht_half, bias)

    return y_pad[:rows].reshape(B, C, M).astype(x.dtype)


if __name__ == "__main__":
    key = jax.random.PRNGKey(0)
    kx, kh = jax.random.split(key)

    B, C, h, w = 2, 4, 16, 16
    N = h * w          # 256
    M = 128            # number of measurements

    # Deterministic synthetic parameters / inputs (no checkpoint loading).
    x = jax.random.uniform(kx, (B, C, h, w), jnp.float32, minval=-1.0, maxval=1.0)
    H = jax.random.uniform(kh, (M, N), jnp.float32)  # measurement matrix

    # One-time operator preparation (cached at model setup in a real pipeline).
    ht_half, bias = prepare_nonoise_params(H)
    ht_half = jax.block_until_ready(ht_half)
    bias = jax.block_until_ready(bias)

    y = nonoise_forward(x, ht_half, bias)
    jax.block_until_ready(y)

    # Reference check in plain JAX (same math as the PyTorch module).
    y_ref = ((x + 1.0) / 2.0).reshape(B, C, N) @ H.T
    assert y.shape == (B, C, M)
    assert jnp.allclose(y, y_ref, atol=1e-4, rtol=1e-4)

    print("KERNEL_OK")
</pallas_src>

<mosaic_0001>
module attributes {stable_mosaic.version = 11 : i64} {
  func.func @_nonoise_matmul_kernel(%arg0: i32, %arg1: i32, %arg2: memref<8x256xf32, #tpu.memory_space<vmem>>, %arg3: memref<256x128xf32, #tpu.memory_space<vmem>>, %arg4: memref<1x128xf32, #tpu.memory_space<vmem>>, %arg5: memref<8x128xf32, #tpu.memory_space<vmem>>) attributes {dimension_semantics = [#tpu.dimension_semantics<parallel>, #tpu.dimension_semantics<arbitrary>], iteration_bounds = array<i64: 1, 1>, scalar_prefetch = 0 : i64, scratch_operands = 0 : i64, tpu.core_type = #tpu.core_type<tc>, window_params = [{transform_indices = @transform_0, window_bounds = array<i64: 8, 256>}, {transform_indices = @transform_1, window_bounds = array<i64: 256, 128>}, {transform_indices = @transform_2, window_bounds = array<i64: 1, 128>}, {transform_indices = @transform_3, window_bounds = array<i64: 8, 128>}]} {
    %c0_i32 = arith.constant 0 : i32
    %0 = arith.cmpi eq, %arg1, %c0_i32 : i32
    %1 = arith.extui %0 : i1 to i32
    %c0_i32_0 = arith.constant 0 : i32
    %2 = arith.cmpi ne, %1, %c0_i32_0 : i32
    scf.if %2 {
      %cst_10 = arith.constant 0.000000e+00 : f32
      %12 = vector.broadcast %cst_10 : f32 to vector<8x128xf32>
      %c0_11 = arith.constant 0 : index
      %c0_12 = arith.constant 0 : index
      %13 = vector.load %arg5[%c0_11, %c0_12] : memref<8x128xf32, #tpu.memory_space<vmem>>, vector<8x128xf32>
      tpu.vector_store %arg5[%c0_11, %c0_12], %12 {strides = array<i32>} : memref<8x128xf32, #tpu.memory_space<vmem>>, vector<8x128xf32>,
    } else {
    }
    %c0 = arith.constant 0 : index
    %c0_1 = arith.constant 0 : index
    %3 = vector.load %arg5[%c0, %c0_1] : memref<8x128xf32, #tpu.memory_space<vmem>>, vector<8x128xf32>
    %c0_2 = arith.constant 0 : index
    %c0_3 = arith.constant 0 : index
    %4 = vector.load %arg2[%c0_2, %c0_3] : memref<8x256xf32, #tpu.memory_space<vmem>>, vector<8x256xf32>
    %c0_4 = arith.constant 0 : index
    %c0_5 = arith.constant 0 : index
    %5 = vector.load %arg3[%c0_4, %c0_5] : memref<256x128xf32, #tpu.memory_space<vmem>>, vector<256x128xf32>
    %cst = arith.constant dense<0.000000e+00> : vector<8x128xf32>
    %6 = tpu.matmul %4, %5, %cst {dimension_numbers = #tpu.dot_dimension_numbers<[1], [0], [0], [1], [0, 0, 1, 1], [], []>} : vector<8x256xf32>, vector<256x128xf32>, vector<8x128xf32> -> vector<8x128xf32>
    %7 = arith.addf %3, %6 : vector<8x128xf32>
    %c0_6 = arith.constant 0 : index
    %c0_7 = arith.constant 0 : index
    %8 = vector.load %arg5[%c0_6, %c0_7] : memref<8x128xf32, #tpu.memory_space<vmem>>, vector<8x128xf32>
    tpu.vector_store %arg5[%c0_6, %c0_7], %7 {strides = array<i32>} : memref<8x128xf32, #tpu.memory_space<vmem>>, vector<8x128xf32>,
    %c0_i32_8 = arith.constant 0 : i32
    %9 = arith.cmpi eq, %arg1, %c0_i32_8 : i32
    %10 = arith.extui %9 : i1 to i32
    %c0_i32_9 = arith.constant 0 : i32
    %11 = arith.cmpi ne, %10, %c0_i32_9 : i32
    scf.if %11 {
      %c0_10 = arith.constant 0 : index
      %c0_11 = arith.constant 0 : index
      %12 = vector.load %arg5[%c0_10, %c0_11] : memref<8x128xf32, #tpu.memory_space<vmem>>, vector<8x128xf32>
      %c0_12 = arith.constant 0 : index
      %c0_13 = arith.constant 0 : index
      %13 = vector.load %arg4[%c0_12, %c0_13] : memref<1x128xf32, #tpu.memory_space<vmem>>, vector<1x128xf32>
      %14 = vector.broadcast %13 : vector<1x128xf32> to vector<8x128xf32>
      %15 = arith.addf %12, %14 : vector<8x128xf32>
      %c0_14 = arith.constant 0 : index
      %c0_15 = arith.constant 0 : index
      %16 = vector.load %arg5[%c0_14, %c0_15] : memref<8x128xf32, #tpu.memory_space<vmem>>, vector<8x128xf32>
      tpu.vector_store %arg5[%c0_14, %c0_15], %15 {strides = array<i32>} : memref<8x128xf32, #tpu.memory_space<vmem>>, vector<8x128xf32>,
    } else {
    }
    return
  }
  func.func @transform_0(%arg0: i32, %arg1: i32) -> (i32, i32) {
    %c0_i32 = arith.constant 0 : i32
    %c0_i32_0 = arith.constant 0 : i32
    return %c0_i32, %arg1 : i32, i32
  }
  func.func @transform_1(%arg0: i32, %arg1: i32) -> (i32, i32) {
    %c0_i32 = arith.constant 0 : i32
    return %arg1, %arg0 : i32, i32
  }
  func.func @transform_2(%arg0: i32, %arg1: i32) -> (i32, i32) {
    %c0_i32 = arith.constant 0 : i32
    %c0_i32_0 = arith.constant 0 : i32
    return %c0_i32, %arg0 : i32, i32
  }
  func.func @transform_3(%arg0: i32, %arg1: i32) -> (i32, i32) {
    %c0_i32 = arith.constant 0 : i32
    %c0_i32_0 = arith.constant 0 : i32
    return %c0_i32, %arg0 : i32, i32
  }
}

</mosaic_0001>

<llo_original>
// kernel: tpu_custom_call.1
$region0: #{tpu_custom_call.1}
  #allocation0 [shape = 'u32[]', space=smem, size = 0x4, offset = 0x4, fixed_abs, tag = 'smem constant byte address 0x4 - core index']
  #allocation1 [shape = 'u32[144,128]{1,0:T(1,128)}', space=vmem, size = 0x12000, scoped, tag = 'internal scratch']
  %s0 = inlined_call_operand.hbm [shape: f32[8,256], index: 0, kind: input, shape index: {}]
  %s1 = inlined_call_operand.hbm [shape: f32[256,128], index: 1, kind: input, shape index: {}]
  %s2 = inlined_call_operand.vmem [shape: f32[1,128], index: 2, kind: input, shape index: {}]
  %s3 = inlined_call_operand.hbm [shape: f32[8,128], index: 3, kind: output, shape index: {}]
  %s4 = sld [smem:[#allocation0]]
  $region38: #{tpu_custom_call.1} parent=0
    _
  %s6 = ssub.s32 1, %s4
  %s7 = scalar_select 0, %s6, %s4
  $region1: #{tpu_custom_call.1} parent=0
    #allocation2 [shape = 'u8[8192]{0}', space=vmem, size = 0x2000, scoped, tag = 'input window, operand 0, single buffered']
    #allocation3 [shape = 's32[1]{0}', space=sflag, size = 0x4, scoped, tag = 'scoped memory for tpu_custom_call.1']
    #allocation4 [shape = 's32[1]{0}', space=sflag, size = 0x4, scoped, tag = 'scoped memory for tpu_custom_call.1']
    #allocation5 [shape = 'u8[131072]{0}', space=vmem, size = 0x20000, scoped, tag = 'input window, operand 1, single buffered']
    #allocation6 [shape = 's32[1]{0}', space=sflag, size = 0x4, scoped, tag = 'scoped memory for tpu_custom_call.1']
    #allocation7 [shape = 'u8[4096]{0}', space=vmem, size = 0x1000, scoped, tag = 'output window, operand 0, single buffered']
    %8 = vsyncpa [#allocation3], 0
    %9 = vsyncpa [#allocation6], 0
    %10 = vsyncpa [#allocation4], 0
    // Predicated region
    $region2: #{tpu_custom_call.1} parent=1 // pred_check
      _
    $region3: #{tpu_custom_call.1} parent=1 // pred_check_branch
      %12 = sbr.rel (0) target = $region5
    $region4: #{tpu_custom_call.1} parent=1 // pred_region
      %s14 = ssub.s32 256, 256
      %15 = vsyncadd [#allocation3], %s14
      %s17 = sshll.u32 [#allocation2], 4
      %s18 = int_to_ptr.vmem [resolvable:$true] %s17
      %20 = dma.hbm_to_vmem [thread:$0]  %s0, 256, %s18, [#allocation3]
    $region5: #{tpu_custom_call.1} parent=1 // pred_fallthru
      _
    // Predicated region
    $region6: #{tpu_custom_call.1} parent=1 // pred_check
      _
    $region7: #{tpu_custom_call.1} parent=1 // pred_check_branch
      %22 = sbr.rel (0) target = $region9
    $region8: #{tpu_custom_call.1} parent=1 // pred_region
      %s24 = ssub.s32 4096, 4096
      %25 = vsyncadd [#allocation6], %s24
      %s26 = sshll.u32 [#allocation5], 4
      %s27 = int_to_ptr.vmem [resolvable:$true] %s26
      %32 = dma.hbm_to_vmem [thread:$0]  %s1, 4096, %s27, [#allocation6], 128, 128, 8
    $region9: #{tpu_custom_call.1} parent=1 // pred_fallthru
      _
    // Predicated region
    $region10: #{tpu_custom_call.1} parent=1 // pred_check
      _
    $region11: #{tpu_custom_call.1} parent=1 // pred_check_branch
      %34 = sbr.rel (0) target = $region13
    $region12: #{tpu_custom_call.1} parent=1 // pred_region
      _
    $region13: #{tpu_custom_call.1} parent=1 // pred_fallthru
      _
    // Predicated region
    $region14: #{tpu_custom_call.1} parent=1 // pred_check
      _
    $region15: #{tpu_custom_call.1} parent=1 // pred_check_branch
      %36 = sbr.rel (0) target = $region17
    $region16: #{tpu_custom_call.1} parent=1 // pred_region
      %37 = dma.done [#allocation3], 256
    $region17: #{tpu_custom_call.1} parent=1 // pred_fallthru
      _
    // Predicated region
    $region18: #{tpu_custom_call.1} parent=1 // pred_check
      _
    $region19: #{tpu_custom_call.1} parent=1 // pred_check_branch
      %39 = sbr.rel (0) target = $region21
    $region20: #{tpu_custom_call.1} parent=1 // pred_region
      %40 = dma.done [#allocation6], 4096
    $region21: #{tpu_custom_call.1} parent=1 // pred_fallthru
      _
    %p41 = scmp.eq.s32.totalorder 0, 0
    // Predicated region
    $region22: #{tpu_custom_call.1} parent=1 // pred_check
      %p42 = pneg %p41
    $region23: #{tpu_custom_call.1} parent=1 // pred_check_branch
      %44 = sbr.rel (%p42) target = $region25
    $region24: #{tpu_custom_call.1} parent=1 // pred_region
      %45 = vst [vmem:[#allocation7] sm:$0xff] 0.0
    $region25: #{tpu_custom_call.1} parent=1 // pred_fallthru
      _
    %v46 = vld [vmem:[#allocation7] sm:$0xff]
    %v47 = vld [vmem:[#allocation2] sm:$0xff]
    %v48 = vld [vmem:[#allocation2 + $0x8] sm:$0xff]
    %v49 = vld [vmem:[#allocation5] sm:$0xff]
    %v50 = vld [vmem:[#allocation5 + $0x8] sm:$0xff]
    %v51 = vld [vmem:[#allocation5 + $0x10] sm:$0xff]
    %v52 = vld [vmem:[#allocation5 + $0x18] sm:$0xff]
    %v53 = vld [vmem:[#allocation5 + $0x20] sm:$0xff]
    %v54 = vld [vmem:[#allocation5 + $0x28] sm:$0xff]
    %v55 = vld [vmem:[#allocation5 + $0x30] sm:$0xff]
    %v56 = vld [vmem:[#allocation5 + $0x38] sm:$0xff]
    %v57 = vld [vmem:[#allocation5 + $0x40] sm:$0xff]
    %v58 = vld [vmem:[#allocation5 + $0x48] sm:$0xff]
    %v59 = vld [vmem:[#allocation5 + $0x50] sm:$0xff]
    %v60 = vld [vmem:[#allocation5 + $0x58] sm:$0xff]
    %v61 = vld [vmem:[#allocation5 + $0x60] sm:$0xff]
    %v62 = vld [vmem:[#allocation5 + $0x68] sm:$0xff]
    %v63 = vld [vmem:[#allocation5 + $0x70] sm:$0xff]
    %v64 = vld [vmem:[#allocation5 + $0x78] sm:$0xff]
    %v65 = vld [vmem:[#allocation5 + $0x80] sm:$0xff]
    %v66 = vld [vmem:[#allocation5 + $0x88] sm:$0xff]
    %v67 = vld [vmem:[#allocation5 + $0x90] sm:$0xff]
    %v68 = vld [vmem:[#allocation5 + $0x98] sm:$0xff]
    %v69 = vld [vmem:[#allocation5 + $0xa0] sm:$0xff]
    %v70 = vld [vmem:[#allocation5 + $0xa8] sm:$0xff]
    %v71 = vld [vmem:[#allocation5 + $0xb0] sm:$0xff]
    %v72 = vld [vmem:[#allocation5 + $0xb8] sm:$0xff]
    %v73 = vld [vmem:[#allocation5 + $0xc0] sm:$0xff]
    %v74 = vld [vmem:[#allocation5 + $0xc8] sm:$0xff]
    %v75 = vld [vmem:[#allocation5 + $0xd0] sm:$0xff]
    %v76 = vld [vmem:[#allocation5 + $0xd8] sm:$0xff]
    %v77 = vld [vmem:[#allocation5 + $0xe0] sm:$0xff]
    %v78 = vld [vmem:[#allocation5 + $0xe8] sm:$0xff]
    %v79 = vld [vmem:[#allocation5 + $0xf0] sm:$0xff]
    %v80 = vld [vmem:[#allocation5 + $0xf8] sm:$0xff]
    %81 = vmatprep.subr.mxu0 0.0
    %82 = vmatpush1.msra.mxu0 %v64
    %83 = vmatprep.subr.mxu0 0.0
    %84 = vmatpush1.msra.mxu0 %v63
    %85 = vmatprep.subr.mxu0 0.0
    %86 = vmatpush1.msra.mxu0 %v62
    %87 = vmatprep.subr.mxu0 0.0
    %88 = vmatpush1.msra.mxu0 %v61
    %89 = vmatprep.subr.mxu0 0.0
    %90 = vmatpush1.msra.mxu0 %v60
    %91 = vmatprep.subr.mxu0 0.0
    %92 = vmatpush1.msra.mxu0 %v59
    %93 = vmatprep.subr.mxu0 0.0
    %94 = vmatpush1.msra.mxu0 %v58
    %95 = vmatprep.subr.mxu0 0.0
    %96 = vmatpush1.msra.mxu0 %v57
    %97 = vmatprep.subr.mxu0 0.0
    %98 = vmatpush1.msra.mxu0 %v56
    %99 = vmatprep.subr.mxu0 0.0
    %100 = vmatpush1.msra.mxu0 %v55
    %101 = vmatprep.subr.mxu0 0.0
    %102 = vmatpush1.msra.mxu0 %v54
    %103 = vmatprep.subr.mxu0 0.0
    %104 = vmatpush1.msra.mxu0 %v53
    %105 = vmatprep.subr.mxu0 0.0
    %106 = vmatpush1.msra.mxu0 %v52
    %107 = vmatprep.subr.mxu0 0.0
    %108 = vmatpush1.msra.mxu0 %v51
    %109 = vmatprep.subr.mxu0 0.0
    %110 = vmatpush1.msra.mxu0 %v50
    %111 = vmatprep.subr.mxu0 0.0
    %112 = vmatpush1.msra.mxu0 %v49
    %113 = vmatprep.subr.mxu0 0.0
    %114 = vmatpush2.msra.mxu0 %v80
    %115 = vmatprep.subr.mxu0 0.0
    %116 = vmatpush2.msra.mxu0 %v79
    %117 = vmatprep.subr.mxu0 0.0
    %118 = vmatpush2.msra.mxu0 %v78
    %119 = vmatprep.subr.mxu0 0.0
    %120 = vmatpush2.msra.mxu0 %v77
    %121 = vmatprep.subr.mxu0 0.0
    %122 = vmatpush2.msra.mxu0 %v76
    %123 = vmatprep.subr.mxu0 0.0
    %124 = vmatpush2.msra.mxu0 %v75
    %125 = vmatprep.subr.mxu0 0.0
    %126 = vmatpush2.msra.mxu0 %v74
    %127 = vmatprep.subr.mxu0 0.0
    %128 = vmatpush2.msra.mxu0 %v73
    %129 = vmatprep.subr.mxu0 0.0
    %130 = vmatpush2.msra.mxu0 %v72
    %131 = vmatprep.subr.mxu0 0.0
    %132 = vmatpush2.msra.mxu0 %v71
    %133 = vmatprep.subr.mxu0 0.0
    %134 = vmatpush2.msra.mxu0 %v70
    %135 = vmatprep.subr.mxu0 0.0
    %136 = vmatpush2.msra.mxu0 %v69
    %137 = vmatprep.subr.mxu0 0.0
    %138 = vmatpush2.msra.mxu0 %v68
    %139 = vmatprep.subr.mxu0 0.0
    %140 = vmatpush2.msra.mxu0 %v67
    %141 = vmatprep.subr.mxu0 0.0
    %142 = vmatpush2.msra.mxu0 %v66
    %143 = vmatprep.subr.mxu0 0.0
    %144 = vmatpush2.msra.mxu0 %v65
    %145 = vmatprep.mubr.f32.mxu0 %v48
    %146 = vmatmul.mubr.f32.gmra.mxu0 %v47
    %v147 = vpop.f32.mrf.mxu0
    %v148 = vadd.f32 0.0, %v147
    %v149 = vpop.f32.mrf.mxu0
    %150 = vdwg.mxu0
    %v151 = vadd.f32 %v46, %v148
    %152 = vst [vmem:[#allocation7] sm:$0xff] %v151
    // Predicated region
    $region26: #{tpu_custom_call.1} parent=1 // pred_check
      %p153 = pneg %p41
    $region27: #{tpu_custom_call.1} parent=1 // pred_check_branch
      %155 = sbr.rel (%p153) target = $region29
    $region28: #{tpu_custom_call.1} parent=1 // pred_region
      %v156 = vld [vmem:[#allocation7] sm:$0xff]
      %v157 = vld [vmem:[%s2] sm:$0x1]
      %v159 = vlaneseq
      %v160 = vshrl.u32 %v159, 7
      %v161 = vsub.s32 0, %v160
      %v162 = vrot.slane %v157, %v161
      %v164 = vadd.f32 %v156, %v162
      %165 = vst [vmem:[#allocation7] sm:$0xff] %v164
    $region29: #{tpu_custom_call.1} parent=1 // pred_fallthru
      _
    // Predicated region
    $region30: #{tpu_custom_call.1} parent=1 // pred_check
      _
    $region31: #{tpu_custom_call.1} parent=1 // pred_check_branch
      %167 = sbr.rel (0) target = $region33
    $region32: #{tpu_custom_call.1} parent=1 // pred_region
      %s169 = ssub.s32 128, 128
      %170 = vsyncadd [#allocation4], %s169
      %s172 = sshll.u32 [#allocation7], 4
      %s173 = int_to_ptr.vmem [resolvable:$true] %s172
      %175 = dma.vmem_to_hbm [thread:$0]  %s173, 128, %s3, [#allocation4]
    $region33: #{tpu_custom_call.1} parent=1 // pred_fallthru
      _
    // Predicated region
    $region34: #{tpu_custom_call.1} parent=1 // pred_check
      _
    $region35: #{tpu_custom_call.1} parent=1 // pred_check_branch
      %177 = sbr.rel (0) target = $region37
    $region36: #{tpu_custom_call.1} parent=1 // pred_region
      %178 = dma.done [#allocation4], 128
    $region37: #{tpu_custom_call.1} parent=1 // pred_fallthru
      _
    %179 = vsyncpa [#allocation3], 1
    %180 = vsyncpa [#allocation6], 1
    %181 = vsyncpa [#allocation4], 1

</llo_original>
